<compile_context>
chip_gen: v6e
topology: v6e:2x2x1
jax: 0.10.0
libtpu: 0.0.40
codegen_flags: <defaults>
</compile_context>

<pallas_src>
import jax
import jax.numpy as jnp
from jax.experimental import pallas as pl
from jax.experimental.pallas import tpu as pltpu

_LANE = 128          # TPU lane width (last-dim alignment for the output)
_NEG_INF = -1e30     # f32 mask value for padded class columns (softmax-safe)


def _round_up(x, m):
    return (x + m - 1) // m * m


def _linear_log_softmax_kernel(x_ref, w_ref, b_ref, o_ref):
    # bf16 MXU matmul, f32 accumulation:  logits = x @ W^T + b
    x = x_ref[...].astype(w_ref.dtype)
    logits = jnp.dot(x, w_ref[...], preferred_element_type=jnp.float32) + b_ref[...]
    # numerically stable log_softmax over the (padded) class axis; padded
    # columns carry a -1e30 bias so exp(shifted) == 0 there.
    m = jnp.max(logits, axis=-1, keepdims=True)
    shifted = logits - m
    lse = jnp.log(jnp.sum(jnp.exp(shifted), axis=-1, keepdims=True))
    o_ref[...] = (shifted - lse).astype(o_ref.dtype)


def _resident_spec(block_shape):
    """Grid-invariant operand: keep it resident and single-buffered."""
    try:
        return pl.BlockSpec(block_shape, lambda i: (0, 0),
                            pipeline_mode=pl.Buffered(1))
    except (TypeError, AttributeError):   # older JAX without pipeline_mode
        return pl.BlockSpec(block_shape, lambda i: (0, 0))


def prepare_params(weight, bias):
    """One-time param prep (NOT in the forward hot path).

    weight: (nb_classes, ft_in) PyTorch layout -> (ft_in, nc_p) transposed,
            bf16, zero-padded along the class dim only (lane-dense output).
    bias:   (nb_classes,) -> (1, nc_p) f32; padded class slots = -1e30.
    """
    nb_classes, ft_in = weight.shape
    nc_p = _round_up(nb_classes, _LANE)

    w_t = jnp.zeros((ft_in, nc_p), dtype=jnp.bfloat16)
    w_t = w_t.at[:, :nb_classes].set(weight.T.astype(jnp.bfloat16))

    b = jnp.full((1, nc_p), _NEG_INF, dtype=jnp.float32)
    b = b.at[0, :nb_classes].set(bias.astype(jnp.float32))
    return w_t, b


def linear_classifier_forward(seq, w_t, b_p, nb_classes, *, block_b=512):
    """seq: (B, ft_in); w_t: (ft_in, nc_p) bf16 pre-transposed/padded; b_p: (1, nc_p) f32."""
    B, ft_in = seq.shape
    K, nc_p = w_t.shape
    assert K == ft_in, "weight not prepared for this ft_in"

    out_dtype = seq.dtype
    x_bytes = jnp.dtype(seq.dtype).itemsize
    o_bytes = jnp.dtype(out_dtype).itemsize
    w_bytes = w_t.size * jnp.dtype(w_t.dtype).itemsize
    b_bytes = b_p.size * jnp.dtype(b_p.dtype).itemsize

    # ---- batch tile selection --------------------------------------------
    if B <= block_b:
        tb = B                                   # full-dim block; no round-up for small batches
    else:
        tb = _round_up(block_b, _LANE)           # lane/MXU-friendly large tiles
        # double-buffered x & out tiles + f32 logits temporaries per row
        per_row = 2 * ft_in * x_bytes + 2 * nc_p * o_bytes + 2 * nc_p * 4
        budget = (48 << 20) - (w_bytes + 2 * b_bytes)   # conservative: fits v7x 64 MiB/TC
        while tb > _LANE and tb * per_row > budget:
            tb //= 2

    grid = (pl.cdiv(B, tb),)                     # ragged trailing tile is clipped by Pallas

    # ---- explicit VMEM budget --------------------------------------------
    vmem_need = (w_bytes + 2 * b_bytes
                 + 2 * tb * ft_in * x_bytes      # double-buffered x tiles
                 + 2 * tb * nc_p * o_bytes       # double-buffered out tiles
                 + 2 * tb * nc_p * 4)            # f32 logits / exp temporaries
    vmem_limit = int(min(max(vmem_need * 5 // 4 + (1 << 20), 16 << 20), 56 << 20))

    cost = pl.CostEstimate(
        flops=2 * B * ft_in * nc_p,
        transcendentals=B * nc_p,
        bytes_accessed=B * ft_in * x_bytes + w_bytes + b_bytes + B * nc_p * o_bytes,
    )

    out_p = pl.pallas_call(
        _linear_log_softmax_kernel,
        out_shape=jax.ShapeDtypeStruct((B, nc_p), out_dtype),
        grid_spec=pltpu.PrefetchScalarGridSpec(
            num_scalar_prefetch=0,
            grid=grid,
            in_specs=[
                pl.BlockSpec((tb, ft_in), lambda i: (i, 0)),   # batch-tiled activations
                _resident_spec((ft_in, nc_p)),                 # weight: resident, single-buffered
                _resident_spec((1, nc_p)),                     # bias:   resident, single-buffered
            ],
            out_specs=pl.BlockSpec((tb, nc_p), lambda i: (i, 0)),
        ),
        compiler_params=pltpu.CompilerParams(
            dimension_semantics=("parallel",),   # lets v7x shard batch tiles across both TCs
            vmem_limit_bytes=vmem_limit,
        ),
        cost_estimate=cost,
    )(seq, w_t, b_p)

    # strip class padding only (there is no batch padding anymore)
    if nc_p != nb_classes:
        out_p = out_p[:, :nb_classes]
    return out_p


def init_params(key, ft_in, nb_classes):
    """xavier_uniform_ weight (PyTorch shape (nb_classes, ft_in)), zero bias."""
    bound = (6.0 / (ft_in + nb_classes)) ** 0.5
    weight = jax.random.uniform(
        key, (nb_classes, ft_in), dtype=jnp.float32, minval=-bound, maxval=bound
    )
    bias = jnp.zeros((nb_classes,), dtype=jnp.float32)
    return weight, bias


if __name__ == "__main__":
    key = jax.random.PRNGKey(0)
    k_x, k_w, k_x2 = jax.random.split(key, 3)

    ft_in, nb_classes = 32, 16
    weight, bias = init_params(k_w, ft_in, nb_classes)

    # one-time parameter prep (transpose + class-dim padding + bf16) outside the hot path
    w_t, b_p = prepare_params(weight, bias)

    def ref_fn(x):
        return jax.nn.log_softmax(x @ weight.T + bias, axis=1)

    # small batch: single tile, tb == B (no 128-row round-up, no padding anywhere)
    x1 = jax.random.normal(k_x, (8, ft_in), dtype=jnp.float32)
    out1 = jax.block_until_ready(linear_classifier_forward(x1, w_t, b_p, nb_classes))
    assert out1.shape == (8, nb_classes)
    assert jnp.allclose(out1, ref_fn(x1), atol=5e-2), "mismatch vs reference (small batch)"

    # larger batch: multi-tile grid with a ragged trailing tile (clipped stores)
    x2 = jax.random.normal(k_x2, (300, ft_in), dtype=jnp.float32)
    out2 = jax.block_until_ready(
        linear_classifier_forward(x2, w_t, b_p, nb_classes, block_b=128)
    )
    assert out2.shape == (300, nb_classes)
    assert jnp.allclose(out2, ref_fn(x2), atol=5e-2), "mismatch vs reference (ragged tiles)"

    print("KERNEL_OK")
</pallas_src>

<mosaic_0001>
module attributes {stable_mosaic.version = 11 : i64} {
  func.func @_linear_log_softmax_kernel(%arg0: i32, %arg1: memref<8x32xf32, #tpu.memory_space<vmem>>, %arg2: memref<32x128xbf16, #tpu.memory_space<vmem>>, %arg3: memref<1x128xf32, #tpu.memory_space<vmem>>, %arg4: memref<8x128xf32, #tpu.memory_space<vmem>>) attributes {dimension_semantics = [#tpu.dimension_semantics<parallel>], iteration_bounds = array<i64: 1>, scalar_prefetch = 0 : i64, scratch_operands = 0 : i64, tpu.core_type = #tpu.core_type<tc>, window_params = [{transform_indices = @transform_0, window_bounds = array<i64: 8, 32>}, {pipeline_mode = #tpu.pipeline_mode<synchronous>, transform_indices = @transform_1, window_bounds = array<i64: 32, 128>}, {pipeline_mode = #tpu.pipeline_mode<synchronous>, transform_indices = @transform_2, window_bounds = array<i64: 1, 128>}, {transform_indices = @transform_3, window_bounds = array<i64: 8, 128>}]} {
    %c0 = arith.constant 0 : index
    %c0_0 = arith.constant 0 : index
    %0 = vector.load %arg1[%c0, %c0_0] : memref<8x32xf32, #tpu.memory_space<vmem>>, vector<8x32xf32>
    %1 = arith.truncf %0 : vector<8x32xf32> to vector<8x32xbf16>
    %c0_1 = arith.constant 0 : index
    %c0_2 = arith.constant 0 : index
    %2 = vector.load %arg2[%c0_1, %c0_2] : memref<32x128xbf16, #tpu.memory_space<vmem>>, vector<32x128xbf16>
    %cst = arith.constant dense<0.000000e+00> : vector<8x128xf32>
    %3 = tpu.matmul %1, %2, %cst {dimension_numbers = #tpu.dot_dimension_numbers<[1], [0], [0], [1], [0, 0, 1, 1], [], []>} : vector<8x32xbf16>, vector<32x128xbf16>, vector<8x128xf32> -> vector<8x128xf32>
    %c0_3 = arith.constant 0 : index
    %c0_4 = arith.constant 0 : index
    %4 = vector.load %arg3[%c0_3, %c0_4] : memref<1x128xf32, #tpu.memory_space<vmem>>, vector<1x128xf32>
    %5 = vector.broadcast %4 : vector<1x128xf32> to vector<8x128xf32>
    %6 = arith.addf %3, %5 : vector<8x128xf32>
    %cst_5 = arith.constant dense<0xFF800000> : vector<8xf32>
    %7 = vector.multi_reduction <maximumf>, %6, %cst_5 [1] : vector<8x128xf32> to vector<8xf32>
    %8 = vector.shape_cast %7 : vector<8xf32> to vector<8x1xf32>
    %9 = vector.broadcast %8 : vector<8x1xf32> to vector<8x128xf32>
    %10 = arith.subf %6, %9 : vector<8x128xf32>
    %11 = math.exp %10 : vector<8x128xf32>
    %cst_6 = arith.constant dense<0.000000e+00> : vector<8xf32>
    %12 = vector.multi_reduction <add>, %11, %cst_6 [1] : vector<8x128xf32> to vector<8xf32>
    %13 = vector.shape_cast %12 : vector<8xf32> to vector<8x1xf32>
    %14 = math.log %13 : vector<8x1xf32>
    %15 = vector.broadcast %14 : vector<8x1xf32> to vector<8x128xf32>
    %16 = arith.subf %10, %15 : vector<8x128xf32>
    %c0_7 = arith.constant 0 : index
    %c0_8 = arith.constant 0 : index
    %17 = vector.load %arg4[%c0_7, %c0_8] : memref<8x128xf32, #tpu.memory_space<vmem>>, vector<8x128xf32>
    tpu.vector_store %arg4[%c0_7, %c0_8], %16 {strides = array<i32>} : memref<8x128xf32, #tpu.memory_space<vmem>>, vector<8x128xf32>,
    return
  }
  func.func @transform_0(%arg0: i32) -> (i32, i32) {
    %c0_i32 = arith.constant 0 : i32
    %c0_i32_0 = arith.constant 0 : i32
    return %arg0, %c0_i32 : i32, i32
  }
  func.func @transform_1(%arg0: i32) -> (i32, i32) {
    %c0_i32 = arith.constant 0 : i32
    %c0_i32_0 = arith.constant 0 : i32
    %c0_i32_1 = arith.constant 0 : i32
    return %c0_i32, %c0_i32_0 : i32, i32
  }
  func.func @transform_2(%arg0: i32) -> (i32, i32) {
    %c0_i32 = arith.constant 0 : i32
    %c0_i32_0 = arith.constant 0 : i32
    %c0_i32_1 = arith.constant 0 : i32
    return %c0_i32, %c0_i32_0 : i32, i32
  }
  func.func @transform_3(%arg0: i32) -> (i32, i32) {
    %c0_i32 = arith.constant 0 : i32
    %c0_i32_0 = arith.constant 0 : i32
    return %arg0, %c0_i32 : i32, i32
  }
}

</mosaic_0001>

<llo_original>
// kernel: tpu_custom_call.1
$region0: #{tpu_custom_call.1}
  #allocation0 [shape = 'u32[]', space=smem, size = 0x4, offset = 0x4, fixed_abs, tag = 'smem constant byte address 0x4 - core index']
  #allocation1 [shape = 'u32[144,128]{1,0:T(1,128)}', space=vmem, size = 0x12000, scoped, tag = 'internal scratch']
  %s0 = inlined_call_operand.hbm [shape: f32[8,32], index: 0, kind: input, shape index: {}]
  %s1 = inlined_call_operand.hbm [shape: bf16[32,128], index: 1, kind: input, shape index: {}]
  %s2 = inlined_call_operand.vmem [shape: f32[1,128], index: 2, kind: input, shape index: {}]
  %s3 = inlined_call_operand.hbm [shape: f32[8,128], index: 3, kind: output, shape index: {}]
  %s4 = sld [smem:[#allocation0]]
  $region30: #{tpu_custom_call.1} parent=0
    _
  %s6 = ssub.s32 1, %s4
  %s7 = scalar_select 0, %s6, %s4
  $region1: #{tpu_custom_call.1} parent=0
    #allocation2 [shape = 'u8[4096]{0}', space=vmem, size = 0x1000, scoped, tag = 'input window, operand 0, single buffered']
    #allocation3 [shape = 's32[1]{0}', space=sflag, size = 0x4, scoped, tag = 'scoped memory for tpu_custom_call.1']
    #allocation4 [shape = 's32[1]{0}', space=sflag, size = 0x4, scoped, tag = 'scoped memory for tpu_custom_call.1']
    #allocation5 [shape = 'u8[8192]{0}', space=vmem, size = 0x2000, scoped, tag = 'input window, operand 1, single buffered']
    #allocation6 [shape = 's32[1]{0}', space=sflag, size = 0x4, scoped, tag = 'scoped memory for tpu_custom_call.1']
    #allocation7 [shape = 'u8[4096]{0}', space=vmem, size = 0x1000, scoped, tag = 'output window, operand 0, single buffered']
    %8 = vsyncpa [#allocation3], 0
    %9 = vsyncpa [#allocation6], 0
    %10 = vsyncpa [#allocation4], 0
    // Predicated region
    $region2: #{tpu_custom_call.1} parent=1 // pred_check
      _
    $region3: #{tpu_custom_call.1} parent=1 // pred_check_branch
      %12 = sbr.rel (0) target = $region5
    $region4: #{tpu_custom_call.1} parent=1 // pred_region
      %s14 = ssub.s32 128, 128
      %15 = vsyncadd [#allocation3], %s14
      %s17 = sshll.u32 [#allocation2], 4
      %s18 = int_to_ptr.vmem [resolvable:$true] %s17
      %20 = dma.hbm_to_vmem [thread:$0]  %s0, 128, %s18, [#allocation3]
    $region5: #{tpu_custom_call.1} parent=1 // pred_fallthru
      _
    // Predicated region
    $region6: #{tpu_custom_call.1} parent=1 // pred_check
      _
    $region7: #{tpu_custom_call.1} parent=1 // pred_check_branch
      %22 = sbr.rel (0) target = $region9
    $region8: #{tpu_custom_call.1} parent=1 // pred_region
      %s24 = ssub.s32 256, 256
      %25 = vsyncadd [#allocation6], %s24
      %s26 = sshll.u32 [#allocation5], 4
      %s27 = int_to_ptr.vmem [resolvable:$true] %s26
      %32 = dma.hbm_to_vmem [thread:$0]  %s1, 256, %s27, [#allocation6], 64, 64, 4
    $region9: #{tpu_custom_call.1} parent=1 // pred_fallthru
      _
    // Predicated region
    $region10: #{tpu_custom_call.1} parent=1 // pred_check
      _
    $region11: #{tpu_custom_call.1} parent=1 // pred_check_branch
      %34 = sbr.rel (0) target = $region13
    $region12: #{tpu_custom_call.1} parent=1 // pred_region
      _
    $region13: #{tpu_custom_call.1} parent=1 // pred_fallthru
      _
    // Predicated region
    $region14: #{tpu_custom_call.1} parent=1 // pred_check
      _
    $region15: #{tpu_custom_call.1} parent=1 // pred_check_branch
      %36 = sbr.rel (0) target = $region17
    $region16: #{tpu_custom_call.1} parent=1 // pred_region
      %37 = dma.done [#allocation3], 128
    $region17: #{tpu_custom_call.1} parent=1 // pred_fallthru
      _
    // Predicated region
    $region18: #{tpu_custom_call.1} parent=1 // pred_check
      _
    $region19: #{tpu_custom_call.1} parent=1 // pred_check_branch
      %39 = sbr.rel (0) target = $region21
    $region20: #{tpu_custom_call.1} parent=1 // pred_region
      %40 = dma.done [#allocation6], 256
    $region21: #{tpu_custom_call.1} parent=1 // pred_fallthru
      _
    %v42 = vld [vmem:[#allocation2] sm:$0xff]
    %v43 = vpack.c.bf16 %v42, %v42
    %v44 = vld [vmem:[#allocation5] sm:$0xf]
    %v45 = vld [vmem:[#allocation5 + $0x4] sm:$0xf]
    %v46 = vld [vmem:[#allocation5 + $0x8] sm:$0xf]
    %v47 = vld [vmem:[#allocation5 + $0xc] sm:$0xf]
    %v48 = vld [vmem:[%s2] sm:$0x1]
    %v50 = vlaneseq
    %v51 = vshrl.u32 %v50, 7
    %v52 = vsub.s32 0, %v51
    %v53 = vrot.slane %v48, %v52
    %v59 = vunpack.c.l.b16 %v44
    %v60 = vunpack.c.l.b16 %v45
    %v61 = vunpack.c.l.b16 %v46
    %v62 = vunpack.c.l.b16 %v47
    %v63 = vpack.c.b16 %v60, %v59
    %v64 = vpack.c.b16 %v62, %v61
    %vm67 = vcmask 261120
    %v69 = vsel %vm67, %v43, 0
    %71 = vmatprep.subr.bf16.mxu0 0
    %72 = vmatpush1.bf16.msra.mxu0 0
    %73 = vmatprep.subr.bf16.mxu0 0
    %74 = vmatpush1.bf16.msra.mxu0 0
    %75 = vmatprep.subr.bf16.mxu0 0
    %76 = vmatpush1.bf16.msra.mxu0 0
    %77 = vmatprep.subr.bf16.mxu0 0
    %78 = vmatpush1.bf16.msra.mxu0 0
    %79 = vmatprep.subr.bf16.mxu0 0
    %80 = vmatpush1.bf16.msra.mxu0 0
    %81 = vmatprep.subr.bf16.mxu0 0
    %82 = vmatpush1.bf16.msra.mxu0 0
    %83 = vmatprep.subr.bf16.mxu0 0
    %84 = vmatpush1.bf16.msra.mxu0 %v64
    %85 = vmatprep.subr.bf16.mxu0 0
    %86 = vmatpush1.bf16.msra.mxu0 %v63
    %87 = vmatprep.subr.bf16.mxu0 0
    %88 = vmatpush2.bf16.msra.mxu0 0
    %89 = vmatprep.subr.bf16.mxu0 0
    %90 = vmatpush2.bf16.msra.mxu0 0
    %91 = vmatprep.subr.bf16.mxu0 0
    %92 = vmatpush2.bf16.msra.mxu0 0
    %93 = vmatprep.subr.bf16.mxu0 0
    %94 = vmatpush2.bf16.msra.mxu0 0
    %95 = vmatprep.subr.bf16.mxu0 0
    %96 = vmatpush2.bf16.msra.mxu0 0
    %97 = vmatprep.subr.bf16.mxu0 0
    %98 = vmatpush2.bf16.msra.mxu0 0
    %99 = vmatprep.subr.bf16.mxu0 0
    %100 = vmatpush2.bf16.msra.mxu0 0
    %101 = vmatprep.subr.bf16.mxu0 0
    %102 = vmatpush2.bf16.msra.mxu0 0
    %103 = vmatprep.mubr.bf16.mxu0 0
    %104 = vmatmul.mubr.bf16.gmra.mxu0 %v69
    %v105 = vpop.f32.mrf.mxu0
    %v106 = vadd.f32 %v53, %v105
    %v107 = vpop.f32.mrf.mxu0
    %v108 = vpop.f32.mrf.mxu0
    %v109 = vpop.f32.mrf.mxu0
    %110 = vdwg.mxu0
    %111 = vmax.xlane.f32.xlu0 %v106
    %v112 = vpop.xlane.xlu0 %111
    %v113 = vsub.f32 %v106, %v112
    %v114 = vmul.f32 %v113, 1.442695
    %v115 = vpow.pop %v114
    %116 = vadd.xlane.f32.xlu0 %v115
    %v117 = vpop.xlane.xlu0 %116
    %v118 = vlog2.pop %v117
    %v119 = vmul.f32 %v118, 0.6931472
    %v120 = vsub.f32 %v113, %v119
    %121 = vst [vmem:[#allocation7] sm:$0xff] %v120
    // Predicated region
    $region22: #{tpu_custom_call.1} parent=1 // pred_check
      _
    $region23: #{tpu_custom_call.1} parent=1 // pred_check_branch
      %123 = sbr.rel (0) target = $region25
    $region24: #{tpu_custom_call.1} parent=1 // pred_region
      %s125 = ssub.s32 128, 128
      %126 = vsyncadd [#allocation4], %s125
      %s128 = sshll.u32 [#allocation7], 4
      %s129 = int_to_ptr.vmem [resolvable:$true] %s128
      %131 = dma.vmem_to_hbm [thread:$0]  %s129, 128, %s3, [#allocation4]
    $region25: #{tpu_custom_call.1} parent=1 // pred_fallthru
      _
    // Predicated region
    $region26: #{tpu_custom_call.1} parent=1 // pred_check
      _
    $region27: #{tpu_custom_call.1} parent=1 // pred_check_branch
      %133 = sbr.rel (0) target = $region29
    $region28: #{tpu_custom_call.1} parent=1 // pred_region
      %134 = dma.done [#allocation4], 128
    $region29: #{tpu_custom_call.1} parent=1 // pred_fallthru
      _
    %135 = vsyncpa [#allocation3], 1
    %136 = vsyncpa [#allocation6], 1
    %137 = vsyncpa [#allocation4], 1

</llo_original>
